<compile_context>
chip_gen: v7x
topology: tpu7x:2x2x1
jax: 0.10.0
libtpu: 0.0.40
codegen_flags: <defaults>
</compile_context>

<pallas_src>
import jax
import jax.numpy as jnp
from jax import lax
from jax.experimental import pallas as pl
from jax.experimental.pallas import tpu as pltpu


def _embed_kernel(x_ref, w_ref, b_ref, pos_ref, o_ref):
    # x_ref: (TM, K)  w_ref: (K, E)  b_ref: (1, E) f32  pos_ref: (TM, E)  o_ref: (TM, E)
    y = jnp.dot(x_ref[...], w_ref[...], preferred_element_type=jnp.float32)
    y = y + b_ref[...] + pos_ref[...].astype(jnp.float32)
    o_ref[...] = y.astype(o_ref.dtype)


def vivit_embeddings(pixel_values, conv_weight, conv_bias, cls_token,
                     position_embeddings, *, tubelet_size, tm=512):
    """ViViTEmbeddings forward (eval mode).

    pixel_values:         (B, C, T, H, W)  -- layout consumed by nn.Conv3d
    conv_weight:          (E, C, kt, kh, kw)
    conv_bias:            (E,)
    cls_token:            (1, 1, E)
    position_embeddings:  (1, num_patches + 1, E)
    Returns embeddings of shape (B, num_patches + 1, E).
    """
    B, C, T, Hh, Ww = pixel_values.shape
    kt, kh, kw = tubelet_size
    E = conv_weight.shape[0]
    Tn, Hn, Wn = T // kt, Hh // kh, Ww // kw
    Np = Tn * Hn * Wn
    K = C * kt * kh * kw

    # --- tubelet patchify (layout plumbing, stays in XLA) -------------------
    x = pixel_values.reshape(B, C, Tn, kt, Hn, kh, Wn, kw)
    x = x.transpose(0, 2, 4, 6, 1, 3, 5, 7)          # (B, Tn, Hn, Wn, C, kt, kh, kw)
    x = x.reshape(B, Np, K)                          # feature order (c, dt, dh, dw)

    w = conv_weight.reshape(E, K).T                  # (K, E)  -> x @ w == Conv3d
    b2d = conv_bias.reshape(1, E).astype(jnp.float32)  # bias cast hoisted out of the kernel
    pos_patch = position_embeddings[0, 1:, :]        # (Np, E) positions for patch tokens

    # --- tile the token dim; keep E (lane dim) un-split ---------------------
    if Np <= tm:
        TM, Np_pad = Np, Np
    else:
        TM = tm
        Np_pad = -(-Np // TM) * TM
    if Np_pad != Np:
        pad = Np_pad - Np
        x = jnp.pad(x, ((0, 0), (0, pad), (0, 0)))
        pos_patch = jnp.pad(pos_patch, ((0, pad), (0, 0)))
    n_tiles = Np_pad // TM

    out = pl.pallas_call(
        _embed_kernel,
        out_shape=jax.ShapeDtypeStruct((B, Np_pad, E), pixel_values.dtype),
        grid_spec=pltpu.PrefetchScalarGridSpec(
            num_scalar_prefetch=0,
            grid=(B, n_tiles),
            in_specs=[
                pl.BlockSpec((None, TM, K), lambda b, n: (b, n, 0)),   # x tile
                pl.BlockSpec((K, E), lambda b, n: (0, 0)),             # W (resident)
                pl.BlockSpec((1, E), lambda b, n: (0, 0)),             # bias (resident)
                pl.BlockSpec((TM, E), lambda b, n: (n, 0)),            # pos tile
            ],
            out_specs=pl.BlockSpec((None, TM, E), lambda b, n: (b, n, 0)),
        ),
        compiler_params=pltpu.CompilerParams(
            dimension_semantics=("parallel", "parallel"),
            vmem_limit_bytes=48 * 1024 * 1024,
        ),
    )(x, w, b2d, pos_patch)

    if Np_pad != Np:
        out = out[:, :Np, :]

    # cls token row (+ its position embedding): one row per batch, trivial in XLA.
    cls_row = (cls_token.astype(jnp.float32)
               + position_embeddings[:, 0:1, :].astype(jnp.float32)).astype(out.dtype)
    cls_rows = jnp.broadcast_to(cls_row, (B, 1, E))
    embeddings = jnp.concatenate([cls_rows, out], axis=1)

    # TODO(synk): dropout is identity in eval mode; training-mode stochastic
    # dropout would use pltpu.prng_seed / pltpu.prng_random_bits in-kernel.
    return embeddings


if __name__ == "__main__":
    # Small config: batch=2, channels=3, frames=8, spatial=16x16,
    # tubelet=(2,4,4) -> 64 patches, hidden=32.
    B, C = 2, 3
    T, Hh, Ww = 8, 16, 16
    tubelet = (2, 4, 4)
    E = 32
    Tn, Hn, Wn = T // tubelet[0], Hh // tubelet[1], Ww // tubelet[2]
    Np = Tn * Hn * Wn
    K = C * tubelet[0] * tubelet[1] * tubelet[2]

    key = jax.random.PRNGKey(0)
    k_x, k_w, k_b, k_cls, k_pos = jax.random.split(key, 5)

    pixel_values = jax.random.normal(k_x, (B, C, T, Hh, Ww), dtype=jnp.float32)
    bound = 1.0 / (K ** 0.5)
    conv_weight = jax.random.uniform(k_w, (E, C) + tubelet, minval=-bound,
                                     maxval=bound, dtype=jnp.float32)
    conv_bias = jax.random.uniform(k_b, (E,), minval=-bound, maxval=bound,
                                   dtype=jnp.float32)
    cls_token = 0.02 * jax.random.normal(k_cls, (1, 1, E), dtype=jnp.float32)
    position_embeddings = 0.02 * jax.random.normal(k_pos, (1, Np + 1, E),
                                                   dtype=jnp.float32)

    out = vivit_embeddings(pixel_values, conv_weight, conv_bias, cls_token,
                           position_embeddings, tubelet_size=tubelet)
    out = jax.block_until_ready(out)

    # Reference: real Conv3d (stride == kernel) + flatten + cls concat + pos add.
    conv_out = lax.conv_general_dilated(
        pixel_values, conv_weight, window_strides=tubelet, padding="VALID",
        dimension_numbers=("NCDHW", "OIDHW", "NCDHW"),
        precision=lax.Precision.HIGHEST)
    conv_out = conv_out + conv_bias.reshape(1, E, 1, 1, 1)
    patches_ref = conv_out.reshape(B, E, Np).transpose(0, 2, 1)
    cls_ref = jnp.broadcast_to(cls_token, (B, 1, E))
    ref = jnp.concatenate([cls_ref, patches_ref], axis=1) + position_embeddings

    assert out.shape == (B, Np + 1, E)
    assert jnp.allclose(out, ref, atol=1e-4, rtol=1e-4), \
        float(jnp.max(jnp.abs(out - ref)))

    print("KERNEL_OK")
</pallas_src>

<mosaic_0001>
module attributes {stable_mosaic.version = 11 : i64} {
  func.func @_embed_kernel(%arg0: i32, %arg1: i32, %arg2: memref<1x64x96xf32, #tpu.memory_space<vmem>>, %arg3: memref<96x32xf32, #tpu.memory_space<vmem>>, %arg4: memref<1x32xf32, #tpu.memory_space<vmem>>, %arg5: memref<64x32xf32, #tpu.memory_space<vmem>>, %arg6: memref<1x64x32xf32, #tpu.memory_space<vmem>>) attributes {dimension_semantics = [#tpu.dimension_semantics<parallel>, #tpu.dimension_semantics<parallel>], iteration_bounds = array<i64: 2, 1>, scalar_prefetch = 0 : i64, scratch_operands = 0 : i64, tpu.core_type = #tpu.core_type<tc>, window_params = [{transform_indices = @transform_0, window_bounds = array<i64: 1, 64, 96>}, {pipeline_mode = #tpu.pipeline_mode<synchronous>, transform_indices = @transform_1, window_bounds = array<i64: 96, 32>}, {pipeline_mode = #tpu.pipeline_mode<synchronous>, transform_indices = @transform_2, window_bounds = array<i64: 1, 32>}, {transform_indices = @transform_3, window_bounds = array<i64: 64, 32>}, {transform_indices = @transform_4, window_bounds = array<i64: 1, 64, 32>}]} {
    %c0 = arith.constant 0 : index
    %c0_0 = arith.constant 0 : index
    %c0_1 = arith.constant 0 : index
    %0 = vector.load %arg2[%c0, %c0_0, %c0_1] : memref<1x64x96xf32, #tpu.memory_space<vmem>>, vector<1x64x96xf32>
    %1 = vector.shape_cast %0 : vector<1x64x96xf32> to vector<64x96xf32>
    %c0_2 = arith.constant 0 : index
    %c0_3 = arith.constant 0 : index
    %2 = vector.load %arg3[%c0_2, %c0_3] : memref<96x32xf32, #tpu.memory_space<vmem>>, vector<96x32xf32>
    %cst = arith.constant dense<0.000000e+00> : vector<64x32xf32>
    %3 = tpu.matmul %1, %2, %cst {dimension_numbers = #tpu.dot_dimension_numbers<[1], [0], [0], [1], [0, 0, 1, 1], [], []>} : vector<64x96xf32>, vector<96x32xf32>, vector<64x32xf32> -> vector<64x32xf32>
    %c0_4 = arith.constant 0 : index
    %c0_5 = arith.constant 0 : index
    %4 = vector.load %arg4[%c0_4, %c0_5] : memref<1x32xf32, #tpu.memory_space<vmem>>, vector<1x32xf32>
    %5 = vector.broadcast %4 : vector<1x32xf32> to vector<64x32xf32>
    %6 = arith.addf %3, %5 : vector<64x32xf32>
    %c0_6 = arith.constant 0 : index
    %c0_7 = arith.constant 0 : index
    %7 = vector.load %arg5[%c0_6, %c0_7] : memref<64x32xf32, #tpu.memory_space<vmem>>, vector<64x32xf32>
    %8 = arith.addf %6, %7 : vector<64x32xf32>
    %c0_8 = arith.constant 0 : index
    %c0_9 = arith.constant 0 : index
    %c0_10 = arith.constant 0 : index
    %9 = vector.load %arg6[%c0_8, %c0_9, %c0_10] : memref<1x64x32xf32, #tpu.memory_space<vmem>>, vector<1x64x32xf32>
    %10 = vector.shape_cast %9 : vector<1x64x32xf32> to vector<64x32xf32>
    %11 = vector.shape_cast %8 : vector<64x32xf32> to vector<1x64x32xf32>
    tpu.vector_store %arg6[%c0_8, %c0_9, %c0_10], %11 {strides = array<i32>} : memref<1x64x32xf32, #tpu.memory_space<vmem>>, vector<1x64x32xf32>,
    return
  }
  func.func @transform_0(%arg0: i32, %arg1: i32) -> (i32, i32, i32) {
    %c0_i32 = arith.constant 0 : i32
    %c0_i32_0 = arith.constant 0 : i32
    return %arg0, %arg1, %c0_i32 : i32, i32, i32
  }
  func.func @transform_1(%arg0: i32, %arg1: i32) -> (i32, i32) {
    %c0_i32 = arith.constant 0 : i32
    %c0_i32_0 = arith.constant 0 : i32
    %c0_i32_1 = arith.constant 0 : i32
    return %c0_i32, %c0_i32_0 : i32, i32
  }
  func.func @transform_2(%arg0: i32, %arg1: i32) -> (i32, i32) {
    %c0_i32 = arith.constant 0 : i32
    %c0_i32_0 = arith.constant 0 : i32
    %c0_i32_1 = arith.constant 0 : i32
    return %c0_i32, %c0_i32_0 : i32, i32
  }
  func.func @transform_3(%arg0: i32, %arg1: i32) -> (i32, i32) {
    %c0_i32 = arith.constant 0 : i32
    %c0_i32_0 = arith.constant 0 : i32
    return %arg1, %c0_i32 : i32, i32
  }
  func.func @transform_4(%arg0: i32, %arg1: i32) -> (i32, i32, i32) {
    %c0_i32 = arith.constant 0 : i32
    %c0_i32_0 = arith.constant 0 : i32
    return %arg0, %arg1, %c0_i32 : i32, i32, i32
  }
}

</mosaic_0001>

<llo_original>
// kernel: tpu_custom_call.1
$region0: #{tpu_custom_call.1}
  #allocation0 [shape = 'u32[]', space=smem, size = 0x4, offset = 0x4, fixed_abs, tag = 'smem constant byte address 0x4 - core index']
  #allocation1 [shape = 'u32[144,128]{1,0:T(1,128)}', space=vmem, size = 0x12000, scoped, tag = 'internal scratch']
  %s0 = inlined_call_operand.vmem [shape: f32[2,64,96], index: 0, kind: input, shape index: {}]
  %s1 = inlined_call_operand.vmem [shape: f32[96,32], index: 1, kind: input, shape index: {}]
  %s2 = inlined_call_operand.vmem [shape: f32[1,32], index: 2, kind: input, shape index: {}]
  %s3 = inlined_call_operand.vmem [shape: f32[64,32], index: 3, kind: input, shape index: {}]
  %s4 = inlined_call_operand.vmem [shape: f32[2,64,32], index: 4, kind: output, shape index: {}]
  %s5 = sld [smem:[#allocation0]]
  $region49: #{tpu_custom_call.1} parent=0
    _
  %s7 = ssub.s32 1, %s5
  %s8 = scalar_select 0, %s7, %s5
  loop: start=0, step=1, limit=4
  $region2: #{tpu_custom_call.1} parent=0 // loop_pre_header
    _
  $region3: #{tpu_custom_call.1} parent=0 // loop_header
    %s10 = sphi 0, %s14
    %p11 = scmp.ge.s32.totalorder %s10, 4
    %s17 = sphi 0, %s29
    %s18 = sphi 0, %s25
    %s19 = sphi 0, %s17
    %s20 = sphi 0, %s18
    %s21 = sphi 0, %s19
    %s22 = sphi 0, %s20
    %s34 = sphi 0, %s36
    %s37 = sphi 0, %s34
    %s38 = sphi 0, %s37
    %s54 = sphi 0, %s38
    %s58 = sphi 0, %s58
    %s60 = sphi 0, %s58
    %s61 = sphi 0, %s60
    %s75 = sphi 0, %s61
    %s79 = sphi 0, %s79
    %s81 = sphi 0, %s79
    %s82 = sphi 0, %s81
    %s96 = sphi 0, %s82
    %s102 = sphi 0, %s104
    %s105 = sphi 0, %s102
    %s106 = sphi 0, %s105
    %s122 = sphi 0, %s106
    %s130 = sphi 0, %s132
    %s133 = sphi 0, %s130
    %s134 = sphi 0, %s133
    %s150 = sphi 0, %s134
  $region4: #{tpu_custom_call.1} parent=0 // loop_header_branch
    %13 = sbr.rel (%p11) target = $region8
  $region5: #{tpu_custom_call.1} parent=0 // loop_body
    %s15 = ssub.s32 %s10, 1
    %s16 = ssub.s32 %s10, 2
    %s23 = sadd.s32 1, %s18
    %p24 = scmp.ge.s32.totalorder %s23, 1
    %s25 = scalar_select %p24, 0, %s23
    %s26 = sadd.s32 1, %s17
    %s27 = scalar_select %p24, %s26, %s17
    %p28 = scmp.ge.s32.totalorder %s27, 2
    %s29 = scalar_select %p28, 0, %s27
    %s30 = ssub.s32 %s17, %s29
    %s31 = ssub.s32 %s18, %s25
    %s32 = sor.u32 %s30, %s31
    %p33 = scmp.eq.s32.totalorder %s32, 0
    %s35 = sadd.s32 %s34, 1
    %s36 = scalar_select %p33, %s34, %s35
    %p39 = pneg %p33
    %p40 = scmp.eq.s32.totalorder %s10, 1
    %p41 = por %p39, %p40
    %p42 = scmp.ne.s32.totalorder %s34, %s37
    %p43 = scmp.eq.s32.totalorder %s10, 0
    %p44 = por %p42, %p43
    %p45 = scmp.ne.s32.totalorder %s34, %s37
    %p46 = scmp.eq.s32.totalorder %s15, 1
    %p47 = por %p45, %p46
    %p48 = scmp.ne.s32.totalorder %s37, %s38
    %p49 = scmp.eq.s32.totalorder %s15, 0
    %p50 = por %p48, %p49
    %p51 = scmp.ne.s32.totalorder %s37, %s38
    %p52 = scmp.eq.s32.totalorder %s16, 1
    %p53 = por %p51, %p52
    %p55 = scmp.ne.s32.totalorder %s38, %s54
    %p56 = scmp.eq.s32.totalorder %s16, 0
    %p57 = por %p55, %p56
    %s59 = sadd.s32 %s58, 1
    %p62 = scmp.eq.s32.totalorder %s10, 1
    %p63 = scmp.ne.s32.totalorder %s58, %s60
    %p64 = scmp.eq.s32.totalorder %s10, 0
    %p65 = por %p63, %p64
    %p66 = scmp.ne.s32.totalorder %s58, %s60
    %p67 = scmp.eq.s32.totalorder %s15, 1
    %p68 = por %p66, %p67
    %p69 = scmp.ne.s32.totalorder %s60, %s61
    %p70 = scmp.eq.s32.totalorder %s15, 0
    %p71 = por %p69, %p70
    %p72 = scmp.ne.s32.totalorder %s60, %s61
    %p73 = scmp.eq.s32.totalorder %s16, 1
    %p74 = por %p72, %p73
    %p76 = scmp.ne.s32.totalorder %s61, %s75
    %p77 = scmp.eq.s32.totalorder %s16, 0
    %p78 = por %p76, %p77
    %s80 = sadd.s32 %s79, 1
    %p83 = scmp.eq.s32.totalorder %s10, 1
    %p84 = scmp.ne.s32.totalorder %s79, %s81
    %p85 = scmp.eq.s32.totalorder %s10, 0
    %p86 = por %p84, %p85
    %p87 = scmp.ne.s32.totalorder %s79, %s81
    %p88 = scmp.eq.s32.totalorder %s15, 1
    %p89 = por %p87, %p88
    %p90 = scmp.ne.s32.totalorder %s81, %s82
    %p91 = scmp.eq.s32.totalorder %s15, 0
    %p92 = por %p90, %p91
    %p93 = scmp.ne.s32.totalorder %s81, %s82
    %p94 = scmp.eq.s32.totalorder %s16, 1
    %p95 = por %p93, %p94
    %p97 = scmp.ne.s32.totalorder %s82, %s96
    %p98 = scmp.eq.s32.totalorder %s16, 0
    %p99 = por %p97, %p98
    %s100 = ssub.s32 %s18, %s25
    %p101 = scmp.eq.s32.totalorder %s100, 0
    %s103 = sadd.s32 %s102, 1
    %s104 = scalar_select %p101, %s102, %s103
    %p107 = pneg %p101
    %p108 = scmp.eq.s32.totalorder %s10, 1
    %p109 = por %p107, %p108
    %p110 = scmp.ne.s32.totalorder %s102, %s105
    %p111 = scmp.eq.s32.totalorder %s10, 0
    %p112 = por %p110, %p111
    %p113 = scmp.ne.s32.totalorder %s102, %s105
    %p114 = scmp.eq.s32.totalorder %s15, 1
    %p115 = por %p113, %p114
    %p116 = scmp.ne.s32.totalorder %s105, %s106
    %p117 = scmp.eq.s32.totalorder %s15, 0
    %p118 = por %p116, %p117
    %p119 = scmp.ne.s32.totalorder %s105, %s106
    %p120 = scmp.eq.s32.totalorder %s16, 1
    %p121 = por %p119, %p120
    %p123 = scmp.ne.s32.totalorder %s106, %s122
    %p124 = scmp.eq.s32.totalorder %s16, 0
    %p125 = por %p123, %p124
    %s126 = ssub.s32 %s17, %s29
    %s127 = ssub.s32 %s18, %s25
    %s128 = sor.u32 %s126, %s127
    %p129 = scmp.eq.s32.totalorder %s128, 0
    %s131 = sadd.s32 %s130, 1
    %s132 = scalar_select %p129, %s130, %s131
    %p135 = pneg %p129
    %p136 = scmp.eq.s32.totalorder %s10, 1
    %p137 = por %p135, %p136
    %p138 = scmp.ne.s32.totalorder %s130, %s133
    %p139 = scmp.eq.s32.totalorder %s10, 0
    %p140 = por %p138, %p139
    %p141 = scmp.ne.s32.totalorder %s130, %s133
    %p142 = scmp.eq.s32.totalorder %s15, 1
    %p143 = por %p141, %p142
    %p144 = scmp.ne.s32.totalorder %s133, %s134
    %p145 = scmp.eq.s32.totalorder %s15, 0
    %p146 = por %p144, %p145
    %p147 = scmp.ne.s32.totalorder %s133, %s134
    %p148 = scmp.eq.s32.totalorder %s16, 1
    %p149 = por %p147, %p148
    %p151 = scmp.ne.s32.totalorder %s134, %s150
    %p152 = scmp.eq.s32.totalorder %s16, 0
    %p153 = por %p151, %p152
    %p154 = scmp.le.s32.totalorder 1, %s10
    %p155 = scmp.lt.s32.totalorder %s10, 3
    %p156 = pnand %p154, %p155
    %p157 = pneg %p156
    // Predicated region
    $region9: #{tpu_custom_call.1} parent=5 // pred_check
      _
    $region10: #{tpu_custom_call.1} parent=5 // pred_check_branch
      %159 = sbr.rel (%p156) target = $region12
    $region11: #{tpu_custom_call.1} parent=5 // pred_region
      %s160 = ssub.s32 %s10, 1
      // Predicated region
      $region13: #{tpu_custom_call.1} parent=11 // pred_check
        %p161 = pneg %p71
      $region14: #{tpu_custom_call.1} parent=11 // pred_check_branch
        %163 = sbr.rel (%p161) target = $region16
      $region15: #{tpu_custom_call.1} parent=11 // pred_region
        _
      $region16: #{tpu_custom_call.1} parent=11 // pred_fallthru
        _
      // Predicated region
      $region17: #{tpu_custom_call.1} parent=11 // pred_check
        %p164 = pneg %p92
      $region18: #{tpu_custom_call.1} parent=11 // pred_check_branch
        %166 = sbr.rel (%p164) target = $region20
      $region19: #{tpu_custom_call.1} parent=11 // pred_region
        _
      $region20: #{tpu_custom_call.1} parent=11 // pred_fallthru
        _
      // Predicated region
      $region21: #{tpu_custom_call.1} parent=11 // pred_check
        %p167 = pneg %p118
      $region22: #{tpu_custom_call.1} parent=11 // pred_check_branch
        %169 = sbr.rel (%p167) target = $region24
      $region23: #{tpu_custom_call.1} parent=11 // pred_region
        %s170 = smul.u32 8, %s20
        %p171 = scmp.lt.s32.totalorder %s170, 7
        %s172 = scalar_select %p171, %s170, 7
        %s173 = smul.addr %s172, 8
        %s174 = scalar_lea.vmem %s3, %s173
        %s175 = smul.u32 8, %s20
      $region24: #{tpu_custom_call.1} parent=11 // pred_fallthru
        _
    $region12: #{tpu_custom_call.1} parent=5 // pred_fallthru
      _
    %p176 = scmp.lt.s32.totalorder %s10, 2
    // Predicated region
    $region25: #{tpu_custom_call.1} parent=5 // pred_check
      %p177 = pneg %p176
    $region26: #{tpu_custom_call.1} parent=5 // pred_check_branch
      %179 = sbr.rel (%p177) target = $region28
    $region27: #{tpu_custom_call.1} parent=5 // pred_region
      // Predicated region
      $region29: #{tpu_custom_call.1} parent=27 // pred_check
        %p180 = pneg %p44
      $region30: #{tpu_custom_call.1} parent=27 // pred_check_branch
        %182 = sbr.rel (%p180) target = $region32
      $region31: #{tpu_custom_call.1} parent=27 // pred_region
        %s183 = smul.u32 8, %s18
        %p184 = scmp.lt.s32.totalorder %s17, 1
        %s185 = scalar_select %p184, %s17, 1
        %p186 = scmp.lt.s32.totalorder %s183, 7
        %s187 = scalar_select %p186, %s183, 7
        %s188 = smul.addr %s185, 8
        %s189 = sadd.s32 %s187, %s188
        %s190 = smul.addr %s189, 8
        %s191 = scalar_lea.vmem %s0, %s190
        %s192 = smul.u32 8, %s18
      $region32: #{tpu_custom_call.1} parent=27 // pred_fallthru
        _
    $region28: #{tpu_custom_call.1} parent=5 // pred_fallthru
      _
    %p193 = scmp.le.s32.totalorder 1, %s10
    %p194 = scmp.lt.s32.totalorder %s10, 3
    %p195 = pnand %p193, %p194
    %p196 = pneg %p195
    // Predicated region
    $region33: #{tpu_custom_call.1} parent=5 // pred_check
      _
    $region34: #{tpu_custom_call.1} parent=5 // pred_check_branch
      %198 = sbr.rel (%p195) target = $region36
    $region35: #{tpu_custom_call.1} parent=5 // pred_region
      %s199 = ssub.s32 %s10, 1
      %s200 = smul.u32 8, %s20
      %p201 = scmp.lt.s32.totalorder %s19, 1
      %s202 = scalar_select %p201, %s19, 1
      %p203 = scmp.lt.s32.totalorder %s200, 7
      %s204 = scalar_select %p203, %s200, 7
      %s205 = smul.addr %s202, 8
      %s206 = sadd.s32 %s204, %s205
      %s207 = smul.addr %s206, 8
      %s208 = scalar_lea.vmem %s0, %s207
      %p209 = pneg %p50
      %p210 = pneg %p47
      %p211 = pneg %p71
      %p212 = pneg %p68
      %p213 = pneg %p92
      %p214 = pneg %p89
      %s215 = smul.u32 8, %s20
      %p216 = scmp.lt.s32.totalorder %s215, 7
      %s217 = scalar_select %p216, %s215, 7
      %s218 = smul.addr %s217, 8
      %s219 = scalar_lea.vmem %s3, %s218
      %p220 = pneg %p118
      %p221 = pneg %p115
      %p222 = pneg %p146
      %p223 = pneg %p143
      %s224 = smul.u32 8, %s20
      %p225 = scmp.lt.s32.totalorder %s19, 1
      %s226 = scalar_select %p225, %s19, 1
      %p227 = scmp.lt.s32.totalorder %s224, 7
      %s228 = scalar_select %p227, %s224, 7
      %s229 = smul.addr %s226, 8
      %s230 = sadd.s32 %s228, %s229
      %s231 = smul.addr %s230, 8
      %s232 = scalar_lea.vmem %s4, %s231
      %s233 = smul.u32 8, %s20
      %p234 = scmp.lt.s32.totalorder %s19, 1
      %s235 = scalar_select %p234, %s19, 1
      %p236 = scmp.lt.s32.totalorder %s233, 7
      %s237 = scalar_select %p236, %s233, 7
      %s238 = smul.addr %s235, 8
      %s239 = sadd.s32 %s237, %s238
      %s240 = smul.addr %s239, 8
      %s241 = scalar_lea.vmem %s0, %s240
      %s242 = smul.u32 8, %s20
      %s243 = smul.u32 8, %s20
      %p244 = scmp.lt.s32.totalorder %s243, 7
      %s245 = scalar_select %p244, %s243, 7
      %s246 = smul.addr %s245, 8
      %s247 = scalar_lea.vmem %s3, %s246
      %s248 = smul.u32 8, %s20
      %s249 = smul.u32 8, %s20
      %p250 = scmp.lt.s32.totalorder %s19, 1
      %s251 = scalar_select %p250, %s19, 1
      %p252 = scmp.lt.s32.totalorder %s249, 7
      %s253 = scalar_select %p252, %s249, 7
      %s254 = smul.addr %s251, 8
      %s255 = sadd.s32 %s253, %s254
      %s256 = smul.addr %s255, 8
      %s257 = scalar_lea.vmem %s4, %s256
      %s258 = smul.u32 8, %s20
      %v259 = vld [vmem:[%s241] sm:$0xff]
      %v260 = vld [vmem:[%s241 + $0x8] sm:$0xff]
      %v261 = vld [vmem:[%s241 + $0x10] sm:$0xff]
      %v262 = vld [vmem:[%s241 + $0x18] sm:$0xff]
      %v263 = vld [vmem:[%s241 + $0x20] sm:$0xff]
      %v264 = vld [vmem:[%s241 + $0x28] sm:$0xff]
      %v265 = vld [vmem:[%s241 + $0x30] sm:$0xff]
      %v266 = vld [vmem:[%s241 + $0x38] sm:$0xff]
      %v267 = vld [vmem:[%s1] sm:$0xff]
      %v268 = vld [vmem:[%s1 + $0x8] sm:$0xff]
      %v269 = vld [vmem:[%s1 + $0x10] sm:$0xff]
      %v270 = vld [vmem:[%s1 + $0x18] sm:$0xff]
      %v271 = vld [vmem:[%s1 + $0x20] sm:$0xff]
      %v272 = vld [vmem:[%s1 + $0x28] sm:$0xff]
      %v273 = vld [vmem:[%s1 + $0x30] sm:$0xff]
      %v274 = vld [vmem:[%s1 + $0x38] sm:$0xff]
      %v275 = vld [vmem:[%s1 + $0x40] sm:$0xff]
      %v276 = vld [vmem:[%s1 + $0x48] sm:$0xff]
      %v277 = vld [vmem:[%s1 + $0x50] sm:$0xff]
      %v278 = vld [vmem:[%s1 + $0x58] sm:$0xff]
      %v279 = vld [vmem:[%s2] sm:$0x1]
      %v281 = vlaneseq
      %v282 = vshrl.u32 %v281, 7
      %v283 = vsub.s32 0, %v282
      %v284 = vrot.slane %v279, %v283
      %vm286 = vcmask 785408
      %v288 = vsel %vm286, %v259, 0
      %v291 = vsel %vm286, %v260, 0
      %v294 = vsel %vm286, %v261, 0
      %v297 = vsel %vm286, %v262, 0
      %v300 = vsel %vm286, %v263, 0
      %v303 = vsel %vm286, %v264, 0
      %v306 = vsel %vm286, %v265, 0
      %v309 = vsel %vm286, %v266, 0
      %311 = vmatprep.subr.mxu0 0.0
      %312 = vmatpush1.msra.mxu0 %v267
      %313 = vmatprep.subr.mxu0 0.0
      %314 = vmatpush1.msra.mxu0 %v268
      %315 = vmatprep.subr.mxu0 0.0
      %316 = vmatpush1.msra.mxu0 %v269
      %317 = vmatprep.subr.mxu0 0.0
      %318 = vmatpush1.msra.mxu0 %v270
      %319 = vmatprep.subr.mxu0 0.0
      %320 = vmatpush1.msra.mxu0 %v271
      %321 = vmatprep.subr.mxu0 0.0
      %322 = vmatpush1.msra.mxu0 %v272
      %323 = vmatprep.subr.mxu0 0.0
      %324 = vmatpush1.msra.mxu0 %v273
      %325 = vmatprep.subr.mxu0 0.0
      %326 = vmatpush1.msra.mxu0 %v274
      %327 = vmatprep.subr.mxu0 0.0
      %328 = vmatpush1.msra.mxu0 %v275
      %329 = vmatprep.subr.mxu0 0.0
      %330 = vmatpush1.msra.mxu0 %v276
      %331 = vmatprep.subr.mxu0 0.0
      %332 = vmatpush1.msra.mxu0 %v277
      %333 = vmatprep.subr.mxu0 0.0
      %334 = vmatpush1.msra.mxu0 %v278
      %335 = vmatprep.subr.mxu0 0.0
      %336 = vmatpush1.msra.mxu0 0.0
      %337 = vmatprep.subr.mxu0 0.0
      %338 = vmatpush1.msra.mxu0 0.0
      %339 = vmatprep.subr.mxu0 0.0
      %340 = vmatpush1.msra.mxu0 0.0
      %341 = vmatprep.subr.mxu0 0.0
      %342 = vmatpush1.msra.mxu0 0.0
      %343 = vmatprep.subr.mxu0 0.0
      %344 = vmatpush1.msra.mxu0 0.0
      %345 = vmatprep.subr.mxu0 0.0
      %346 = vmatpush1.msra.mxu0 0.0
      %347 = vmatprep.subr.mxu0 0.0
      %348 = vmatpush1.msra.mxu0 0.0
      %349 = vmatprep.subr.mxu0 0.0
      %350 = vmatpush1.msra.mxu0 0.0
      %351 = vmatprep.subr.mxu0 0.0
      %352 = vmatpush1.msra.mxu0 0.0
      %353 = vmatprep.subr.mxu0 0.0
      %354 = vmatpush1.msra.mxu0 0.0
      %355 = vmatprep.subr.mxu0 0.0
      %356 = vmatpush1.msra.mxu0 0.0
      %357 = vmatprep.subr.mxu0 0.0
      %358 = vmatpush1.msra.mxu0 0.0
      %359 = vmatprep.subr.mxu0 0.0
      %360 = vmatpush1.msra.mxu0 0.0
      %361 = vmatprep.subr.mxu0 0.0
      %362 = vmatpush1.msra.mxu0 0.0
      %363 = vmatprep.subr.mxu0 0.0
      %364 = vmatpush1.msra.mxu0 0.0
      %365 = vmatprep.subr.mxu0 0.0
      %366 = vmatpush1.msra.mxu0 0.0
      %367 = vmatprep.subr.mxu0 0.0
      %368 = vmatpush1.msra.mxu0 0.0
      %369 = vmatprep.subr.mxu0 0.0
      %370 = vmatpush1.msra.mxu0 0.0
      %371 = vmatprep.subr.mxu0 0.0
      %372 = vmatpush1.msra.mxu0 0.0
      %373 = vmatprep.subr.mxu0 0.0
      %374 = vmatpush1.msra.mxu0 0.0
      %375 = vmatprep.mubr.f32.mxu0 0.0
      %376 = vmatmul.mubr.f32.gmra.mrb[0].mxu0 %v288
      %v377 = vpop.f32.mrb[0].mxu0
      %v378 = vadd.f32 %v284, %v377
      %v379 = vpop.f32.mrb[0].mxu0
      %380 = vmatprep.mubr.f32.mxu0 0.0
      %381 = vmatmul.mubr.f32.gmra.mrb[0].mxu0 %v291
      %v382 = vpop.f32.mrb[0].mxu0
      %v383 = vadd.f32 %v284, %v382
      %v384 = vpop.f32.mrb[0].mxu0
      %385 = vmatprep.mubr.f32.mxu0 0.0
      %386 = vmatmul.mubr.f32.gmra.mrb[0].mxu0 %v294
      %v387 = vpop.f32.mrb[0].mxu0
      %v388 = vadd.f32 %v284, %v387
      %v389 = vpop.f32.mrb[0].mxu0
      %390 = vmatprep.mubr.f32.mxu0 0.0
      %391 = vmatmul.mubr.f32.gmra.mrb[0].mxu0 %v297
      %v392 = vpop.f32.mrb[0].mxu0
      %v393 = vadd.f32 %v284, %v392
      %v394 = vpop.f32.mrb[0].mxu0
      %395 = vmatprep.mubr.f32.mxu0 0.0
      %396 = vmatmul.mubr.f32.gmra.mrb[0].mxu0 %v300
      %v397 = vpop.f32.mrb[0].mxu0
      %v398 = vadd.f32 %v284, %v397
      %v399 = vpop.f32.mrb[0].mxu0
      %400 = vmatprep.mubr.f32.mxu0 0.0
      %401 = vmatmul.mubr.f32.gmra.mrb[0].mxu0 %v303
      %v402 = vpop.f32.mrb[0].mxu0
      %v403 = vadd.f32 %v284, %v402
      %v404 = vpop.f32.mrb[0].mxu0
      %405 = vmatprep.mubr.f32.mxu0 0.0
      %406 = vmatmul.mubr.f32.gmra.mrb[0].mxu0 %v306
      %v407 = vpop.f32.mrb[0].mxu0
      %v408 = vadd.f32 %v284, %v407
      %v409 = vpop.f32.mrb[0].mxu0
      %410 = vmatprep.mubr.f32.mxu0 0.0
      %411 = vmatmul.mubr.f32.gmra.mrb[0].mxu0 %v309
      %v412 = vpop.f32.mrb[0].mxu0
      %v413 = vadd.f32 %v284, %v412
      %v414 = vpop.f32.mrb[0].mxu0
      %415 = vdwg.mxu0
      %v416 = vld [vmem:[%s247] sm:$0xff]
      %v417 = vld [vmem:[%s247 + $0x8] sm:$0xff]
      %v418 = vld [vmem:[%s247 + $0x10] sm:$0xff]
      %v419 = vld [vmem:[%s247 + $0x18] sm:$0xff]
      %v420 = vld [vmem:[%s247 + $0x20] sm:$0xff]
      %v421 = vld [vmem:[%s247 + $0x28] sm:$0xff]
      %v422 = vld [vmem:[%s247 + $0x30] sm:$0xff]
      %v423 = vld [vmem:[%s247 + $0x38] sm:$0xff]
      %v424 = vadd.f32 %v378, %v416
      %v425 = vadd.f32 %v383, %v417
      %v426 = vadd.f32 %v388, %v418
      %v427 = vadd.f32 %v393, %v419
      %v428 = vadd.f32 %v398, %v420
      %v429 = vadd.f32 %v403, %v421
      %v430 = vadd.f32 %v408, %v422
      %v431 = vadd.f32 %v413, %v423
      %vm432 = vcmask 261120
      %433 = vst.msk [vmem:[%s257] sm:$0xff] %vm432, %v424
      %434 = vst.msk [vmem:[%s257 + $0x8] sm:$0xff] %vm432, %v425
      %435 = vst.msk [vmem:[%s257 + $0x10] sm:$0xff] %vm432, %v426
      %436 = vst.msk [vmem:[%s257 + $0x18] sm:$0xff] %vm432, %v427
      %437 = vst.msk [vmem:[%s257 + $0x20] sm:$0xff] %vm432, %v428
      %438 = vst.msk [vmem:[%s257 + $0x28] sm:$0xff] %vm432, %v429
      %439 = vst.msk [vmem:[%s257 + $0x30] sm:$0xff] %vm432, %v430
      %440 = vst.msk [vmem:[%s257 + $0x38] sm:$0xff] %vm432, %v431
      %s441 = smul.u32 8, %s20
      %p442 = scmp.lt.s32.totalorder %s19, 1
      %s443 = scalar_select %p442, %s19, 1
      %p444 = scmp.lt.s32.totalorder %s441, 7
      %s445 = scalar_select %p444, %s441, 7
      %s446 = smul.addr %s443, 8
      %s447 = sadd.s32 %s445, %s446
      %s448 = smul.addr %s447, 8
      %s449 = scalar_lea.vmem %s4, %s448
      // Predicated region
      $region37: #{tpu_custom_call.1} parent=35 // pred_check
        %p450 = pneg %p143
      $region38: #{tpu_custom_call.1} parent=35 // pred_check_branch
        %452 = sbr.rel (%p450) target = $region40
      $region39: #{tpu_custom_call.1} parent=35 // pred_region
        %s453 = smul.u32 8, %s20
      $region40: #{tpu_custom_call.1} parent=35 // pred_fallthru
        _
    $region36: #{tpu_custom_call.1} parent=5 // pred_fallthru
      _
    %p454 = scmp.le.s32.totalorder 2, %s10
    // Predicated region
    $region41: #{tpu_custom_call.1} parent=5 // pred_check
      %p455 = pneg %p454
    $region42: #{tpu_custom_call.1} parent=5 // pred_check_branch
      %457 = sbr.rel (%p455) target = $region44
    $region43: #{tpu_custom_call.1} parent=5 // pred_region
      %s458 = ssub.s32 %s10, 2
      // Predicated region
      $region45: #{tpu_custom_call.1} parent=43 // pred_check
        %p459 = pneg %p149
      $region46: #{tpu_custom_call.1} parent=43 // pred_check_branch
        %461 = sbr.rel (%p459) target = $region48
      $region47: #{tpu_custom_call.1} parent=43 // pred_region
        %s462 = smul.u32 8, %s22
        %p463 = scmp.lt.s32.totalorder %s21, 1
        %s464 = scalar_select %p463, %s21, 1
        %p465 = scmp.lt.s32.totalorder %s462, 7
        %s466 = scalar_select %p465, %s462, 7
        %s467 = smul.addr %s464, 8
        %s468 = sadd.s32 %s466, %s467
        %s469 = smul.addr %s468, 8
        %s470 = scalar_lea.vmem %s4, %s469
      $region48: #{tpu_custom_call.1} parent=43 // pred_fallthru
        _
    $region44: #{tpu_custom_call.1} parent=5 // pred_fallthru
      _
  $region6: #{tpu_custom_call.1} parent=0 // loop_footer
    %s14 = sadd.s32 1, %s10
  $region7: #{tpu_custom_call.1} parent=0 // loop_footer_branch
    %9 = sbr.rel target = $region3
  $region8: #{tpu_custom_call.1} parent=0 // loop_exit
    _

</llo_original>
